<compile_context>
chip_gen: v7x
topology: tpu7x:2x2x1
jax: 0.10.0
libtpu: 0.0.40
codegen_flags: <defaults>
</compile_context>

<pallas_src>
import functools

import jax
import jax.numpy as jnp
from jax.experimental import pallas as pl
from jax.experimental.pallas import tpu as pltpu

_MAX_BATCH_TILE = 4096   # buffers stay a few MiB even at this tile size


def _round_up(x, m):
    return ((x + m - 1) // m) * m


def _choose_tile(batch):
    """Pick (tile_rows, padded_batch).

    * batch rounded up to 8 sublanes (avoids sublane-masked stores),
    * batches > 16 split into >= 2 grid steps (v7x megacore),
    * tile capped at _MAX_BATCH_TILE (pipelining for very large batches).
    """
    b8 = max(_round_up(batch, 8), 8)
    if b8 <= 16:
        return b8, b8
    tb = min(_round_up((b8 + 1) // 2, 8), _MAX_BATCH_TILE)
    return tb, _round_up(b8, tb)


def _ac_kernel(x_ref, w1_ref, b1_ref, w2_ref, b2_ref, out_ref, *, n_actions):
    """Fused actor-critic forward.

    x:   [TB, F]   f32
    w1:  [F, 2H]   bf16  (pi-hidden || v-hidden)
    w2:  [2H, 128] bf16  block-diagonal (pi logits lanes 0..A-1, v in lane A)
    b1/b2: f32 biases
    out: [TB, 128] lane-dense slab: softmax(pi) in lanes 0..A-1, v in lane A.
    """
    x = x_ref[...].astype(jnp.bfloat16)                              # [TB, F]

    # Layer 1 (both heads fused): one bf16 MXU matmul, f32 accumulate.
    h = jnp.dot(x, w1_ref[...], preferred_element_type=jnp.float32)
    h = jnp.maximum(h + b1_ref[...], 0.0)                            # [TB, 2H]

    # Layer 2 (block-diagonal): logits land in lanes 0..A-1, value in lane A.
    z = jnp.dot(h.astype(jnp.bfloat16), w2_ref[...],
                preferred_element_type=jnp.float32)
    z = z + b2_ref[...]                                              # [TB, 128]

    # Masked softmax over the action lanes only.
    lane = jax.lax.broadcasted_iota(jnp.int32, z.shape, 1)
    act_mask = lane < n_actions
    neg_big = jnp.float32(-1e30)
    m = jnp.max(jnp.where(act_mask, z, neg_big), axis=-1, keepdims=True)
    # Mask *before* the exp: masked lanes exp(-1e30) underflow to exactly 0.
    e = jnp.exp(jnp.where(act_mask, z - m, neg_big))
    denom = jnp.sum(e, axis=-1, keepdims=True)
    inv = pl.reciprocal(denom)            # exact: rows sum to 1 within ~1e-6
    pi = e * inv

    # Lane A carries v (straight from z); lanes 0..A-1 carry pi; rest zero.
    out_ref[...] = jnp.where(lane == n_actions, z, pi).astype(out_ref.dtype)


@functools.partial(jax.jit, static_argnames=("n_actions", "out_dtype"))
def _ac_forward_packed(state, w1, b1, w2, b2, *, n_actions,
                       out_dtype=jnp.float32):
    B, F = state.shape
    H2 = w1.shape[1]          # 2 * hidden_dim
    OUT = w2.shape[1]         # lane-dense output width (128)

    tb, b_pad = _choose_tile(B)
    if b_pad != B:
        state = jnp.pad(state, ((0, b_pad - B), (0, 0)))
    grid = (b_pad // tb,)

    kernel = functools.partial(_ac_kernel, n_actions=n_actions)
    out = pl.pallas_call(
        kernel,
        out_shape=jax.ShapeDtypeStruct((b_pad, OUT), out_dtype),
        grid=grid,
        in_specs=[
            pl.BlockSpec((tb, F), lambda i: (i, 0)),     # state tile
            pl.BlockSpec((F, H2), lambda i: (0, 0)),     # resident bf16 weights
            pl.BlockSpec((1, H2), lambda i: (0, 0)),
            pl.BlockSpec((H2, OUT), lambda i: (0, 0)),
            pl.BlockSpec((1, OUT), lambda i: (0, 0)),
        ],
        out_specs=pl.BlockSpec((tb, OUT), lambda i: (i, 0)),
        compiler_params=pltpu.CompilerParams(
            dimension_semantics=("parallel",)),          # megacore on v7x
    )(state, w1, b1, w2, b2)
    return out[:B] if b_pad != B else out


def _apply(state, packed):
    """Returns (pi [B, A], v [B, 1]) for 2-D state."""
    n_actions = packed["n_actions"]
    out = _ac_forward_packed(state, packed["w1"], packed["b1"],
                             packed["w2"], packed["b2"], n_actions=n_actions)
    pi = out[:, :n_actions]
    v = out[:, n_actions:n_actions + 1]
    return pi, v


def ac_pi(state, packed, dim=0):
    """Mirror of AC.pi(state, dim).  1-D state ([F]) or batched [B, F]."""
    squeeze = state.ndim == 1
    # Softmax is taken over the action axis inside the kernel; `dim` must be
    # consistent (matches PyTorch usage: dim=0 for 1-D, dim=1 for batched).
    if squeeze:
        assert dim in (0, -1), "1-D state: softmax dim must be the action axis"
        x = state[None, :]
    else:
        assert dim in (1, -1), "batched state: softmax dim must be the action axis"
        x = state
    pi, _ = _apply(x, packed)
    return pi[0] if squeeze else pi


def ac_v(state, packed):
    """Mirror of AC.v(state)."""
    squeeze = state.ndim == 1
    x = state[None, :] if squeeze else state
    _, v = _apply(x, packed)
    return v[0] if squeeze else v


def _linear_init(key, fan_in, fan_out):
    """nn.Linear-style init; weight returned as [in, out], bias as [1, out]."""
    kw, kb = jax.random.split(key)
    bound = 1.0 / jnp.sqrt(jnp.asarray(fan_in, jnp.float32))
    w = jax.random.uniform(kw, (fan_in, fan_out), jnp.float32, -bound, bound)
    b = jax.random.uniform(kb, (1, fan_out), jnp.float32, -bound, bound)
    return w, b


def init_ac_params(key, input_shape, n_actions, hidden_dim=64):
    k1, k2, k3, k4 = jax.random.split(key, 4)
    w1_pi, b1_pi = _linear_init(k1, input_shape, hidden_dim)
    w2_pi, b2_pi = _linear_init(k2, hidden_dim, n_actions)
    w1_v, b1_v = _linear_init(k3, input_shape, hidden_dim)
    w2_v, b2_v = _linear_init(k4, hidden_dim, 1)
    return dict(w1_pi=w1_pi, b1_pi=b1_pi, w2_pi=w2_pi, b2_pi=b2_pi,
                w1_v=w1_v, b1_v=b1_v, w2_v=w2_v, b2_v=b2_v)


def pack_ac_params(params, n_actions, out_pad=128):
    """One-time packing of the two heads into fused, lane-dense operands."""
    assert n_actions + 1 <= out_pad, "value lane must fit in the output slab"
    fan_in, hidden = params["w1_pi"].shape
    # Layer 1: [F, 2H] bf16 weights, [1, 2H] f32 bias.
    w1 = jnp.concatenate([params["w1_pi"], params["w1_v"]], axis=1)
    b1 = jnp.concatenate([params["b1_pi"], params["b1_v"]], axis=1)
    # Layer 2: block-diagonal [2H, out_pad] bf16; biases folded into [1, out_pad] f32.
    w2 = jnp.zeros((2 * hidden, out_pad), jnp.float32)
    w2 = w2.at[:hidden, :n_actions].set(params["w2_pi"])
    w2 = w2.at[hidden:, n_actions:n_actions + 1].set(params["w2_v"])
    b2 = jnp.zeros((1, out_pad), jnp.float32)
    b2 = b2.at[:, :n_actions].set(params["b2_pi"])
    b2 = b2.at[:, n_actions:n_actions + 1].set(params["b2_v"])
    return dict(w1=w1.astype(jnp.bfloat16), b1=b1,
                w2=w2.astype(jnp.bfloat16), b2=b2, n_actions=int(n_actions))


if __name__ == "__main__":
    INPUT_SHAPE = 16     # state feature dim
    N_ACTIONS = 4
    HIDDEN = 64
    BATCH = 8

    key = jax.random.PRNGKey(0)
    kp, ks = jax.random.split(key)
    raw = init_ac_params(kp, INPUT_SHAPE, N_ACTIONS, HIDDEN)
    packed = pack_ac_params(raw, N_ACTIONS)
    state = jax.random.normal(ks, (BATCH, INPUT_SHAPE), jnp.float32)

    pi_out = ac_pi(state, packed, dim=1)
    v_out = ac_v(state, packed)
    jax.block_until_ready((pi_out, v_out))

    # References in plain JAX:
    #  * bf16-emulated reference (same operand dtypes as the kernel) -> tight check
    #  * full-f32 reference (original module semantics)              -> loose check
    def ref(x, bf16_ops):
        c = ((lambda a: a.astype(jnp.bfloat16)) if bf16_ops else (lambda a: a))
        h = jnp.maximum(
            jnp.dot(c(x), c(raw["w1_pi"]), preferred_element_type=jnp.float32)
            + raw["b1_pi"], 0.0)
        logits = jnp.dot(c(h), c(raw["w2_pi"]),
                         preferred_element_type=jnp.float32) + raw["b2_pi"]
        p = jax.nn.softmax(logits, axis=-1)
        hv = jnp.maximum(
            jnp.dot(c(x), c(raw["w1_v"]), preferred_element_type=jnp.float32)
            + raw["b1_v"], 0.0)
        val = jnp.dot(c(hv), c(raw["w2_v"]),
                      preferred_element_type=jnp.float32) + raw["b2_v"]
        return p, val

    p_emu, v_emu = ref(state, bf16_ops=True)
    p_f32, v_f32 = ref(state, bf16_ops=False)

    assert pi_out.shape == (BATCH, N_ACTIONS)
    assert v_out.shape == (BATCH, 1)
    # Tight check vs the bf16-emulated reference (validates kernel logic).
    assert jnp.allclose(pi_out, p_emu, atol=1e-3, rtol=1e-3)
    assert jnp.allclose(v_out, v_emu, atol=1e-3, rtol=1e-3)
    # Loose check vs the f32 reference (bf16 MXU operands -> ~1e-2 drift).
    assert jnp.allclose(pi_out, p_f32, atol=5e-2, rtol=5e-2)
    assert jnp.allclose(v_out, v_f32, atol=5e-2, rtol=5e-2)
    # Exact-reciprocal softmax: rows sum to 1 tightly.
    assert jnp.allclose(jnp.sum(pi_out, axis=-1), 1.0, atol=1e-3)

    # Single-state (1-D) path, matching pi(state, dim=0) / v(state).
    single_pi = ac_pi(state[0], packed, dim=0)
    single_v = ac_v(state[0], packed)
    jax.block_until_ready((single_pi, single_v))
    assert single_pi.shape == (N_ACTIONS,)
    assert single_v.shape == (1,)
    assert jnp.allclose(single_pi, p_emu[0], atol=1e-3, rtol=1e-3)
    assert jnp.allclose(single_v, v_emu[0], atol=1e-3, rtol=1e-3)
    assert jnp.allclose(jnp.sum(single_pi), 1.0, atol=1e-3)

    print("KERNEL_OK")
</pallas_src>

<mosaic_0001>
module attributes {stable_mosaic.version = 11 : i64} {
  func.func @_ac_kernel(%arg0: i32, %arg1: memref<8x16xf32, #tpu.memory_space<vmem>>, %arg2: memref<16x128xbf16, #tpu.memory_space<vmem>>, %arg3: memref<1x128xf32, #tpu.memory_space<vmem>>, %arg4: memref<128x128xbf16, #tpu.memory_space<vmem>>, %arg5: memref<1x128xf32, #tpu.memory_space<vmem>>, %arg6: memref<8x128xf32, #tpu.memory_space<vmem>>) attributes {dimension_semantics = [#tpu.dimension_semantics<parallel>], iteration_bounds = array<i64: 1>, scalar_prefetch = 0 : i64, scratch_operands = 0 : i64, tpu.core_type = #tpu.core_type<tc>, window_params = [{transform_indices = @transform_0, window_bounds = array<i64: 8, 16>}, {pipeline_mode = #tpu.pipeline_mode<synchronous>, transform_indices = @transform_1, window_bounds = array<i64: 16, 128>}, {pipeline_mode = #tpu.pipeline_mode<synchronous>, transform_indices = @transform_2, window_bounds = array<i64: 1, 128>}, {pipeline_mode = #tpu.pipeline_mode<synchronous>, transform_indices = @transform_3, window_bounds = array<i64: 128, 128>}, {pipeline_mode = #tpu.pipeline_mode<synchronous>, transform_indices = @transform_4, window_bounds = array<i64: 1, 128>}, {transform_indices = @transform_5, window_bounds = array<i64: 8, 128>}]} {
    %c0 = arith.constant 0 : index
    %c0_0 = arith.constant 0 : index
    %0 = vector.load %arg1[%c0, %c0_0] : memref<8x16xf32, #tpu.memory_space<vmem>>, vector<8x16xf32>
    %1 = arith.truncf %0 : vector<8x16xf32> to vector<8x16xbf16>
    %c0_1 = arith.constant 0 : index
    %c0_2 = arith.constant 0 : index
    %2 = vector.load %arg2[%c0_1, %c0_2] : memref<16x128xbf16, #tpu.memory_space<vmem>>, vector<16x128xbf16>
    %cst = arith.constant dense<0.000000e+00> : vector<8x128xf32>
    %3 = tpu.matmul %1, %2, %cst {dimension_numbers = #tpu.dot_dimension_numbers<[1], [0], [0], [1], [0, 0, 1, 1], [], []>} : vector<8x16xbf16>, vector<16x128xbf16>, vector<8x128xf32> -> vector<8x128xf32>
    %c0_3 = arith.constant 0 : index
    %c0_4 = arith.constant 0 : index
    %4 = vector.load %arg3[%c0_3, %c0_4] : memref<1x128xf32, #tpu.memory_space<vmem>>, vector<1x128xf32>
    %5 = vector.broadcast %4 : vector<1x128xf32> to vector<8x128xf32>
    %6 = arith.addf %3, %5 : vector<8x128xf32>
    %cst_5 = arith.constant 0.000000e+00 : f32
    %7 = vector.broadcast %cst_5 : f32 to vector<8x128xf32>
    %8 = arith.maximumf %6, %7 : vector<8x128xf32>
    %9 = arith.truncf %8 : vector<8x128xf32> to vector<8x128xbf16>
    %c0_6 = arith.constant 0 : index
    %c0_7 = arith.constant 0 : index
    %10 = vector.load %arg4[%c0_6, %c0_7] : memref<128x128xbf16, #tpu.memory_space<vmem>>, vector<128x128xbf16>
    %cst_8 = arith.constant dense<0.000000e+00> : vector<8x128xf32>
    %11 = tpu.matmul %9, %10, %cst_8 {dimension_numbers = #tpu.dot_dimension_numbers<[1], [0], [0], [1], [0, 0, 1, 1], [], []>} : vector<8x128xbf16>, vector<128x128xbf16>, vector<8x128xf32> -> vector<8x128xf32>
    %c0_9 = arith.constant 0 : index
    %c0_10 = arith.constant 0 : index
    %12 = vector.load %arg5[%c0_9, %c0_10] : memref<1x128xf32, #tpu.memory_space<vmem>>, vector<1x128xf32>
    %13 = vector.broadcast %12 : vector<1x128xf32> to vector<8x128xf32>
    %14 = arith.addf %11, %13 : vector<8x128xf32>
    %15 = tpu.iota {dimensions = array<i32: 1>} : vector<8x128xi32>
    %c4_i32 = arith.constant 4 : i32
    %16 = vector.broadcast %c4_i32 : i32 to vector<8x128xi32>
    %17 = arith.cmpi slt, %15, %16 : vector<8x128xi32>
    %cst_11 = arith.constant -1.000000e+30 : f32
    %18 = vector.broadcast %cst_11 : f32 to vector<8x128xf32>
    %19 = arith.select %17, %14, %18 : vector<8x128xi1>, vector<8x128xf32>
    %cst_12 = arith.constant dense<0xFF800000> : vector<8xf32>
    %20 = vector.multi_reduction <maximumf>, %19, %cst_12 [1] : vector<8x128xf32> to vector<8xf32>
    %21 = vector.shape_cast %20 : vector<8xf32> to vector<8x1xf32>
    %22 = vector.broadcast %21 : vector<8x1xf32> to vector<8x128xf32>
    %23 = arith.subf %14, %22 : vector<8x128xf32>
    %cst_13 = arith.constant -1.000000e+30 : f32
    %24 = vector.broadcast %cst_13 : f32 to vector<8x128xf32>
    %25 = arith.select %17, %23, %24 : vector<8x128xi1>, vector<8x128xf32>
    %26 = math.exp %25 : vector<8x128xf32>
    %cst_14 = arith.constant dense<0.000000e+00> : vector<8xf32>
    %27 = vector.multi_reduction <add>, %26, %cst_14 [1] : vector<8x128xf32> to vector<8xf32>
    %28 = vector.shape_cast %27 : vector<8xf32> to vector<8x1xf32>
    %29 = tpu.reciprocal %28 : vector<8x1xf32> -> vector<8x1xf32>
    %30 = vector.broadcast %29 : vector<8x1xf32> to vector<8x128xf32>
    %31 = arith.mulf %26, %30 : vector<8x128xf32>
    %c4_i32_15 = arith.constant 4 : i32
    %32 = vector.broadcast %c4_i32_15 : i32 to vector<8x128xi32>
    %33 = arith.cmpi eq, %15, %32 : vector<8x128xi32>
    %34 = arith.select %33, %14, %31 : vector<8x128xi1>, vector<8x128xf32>
    %c0_16 = arith.constant 0 : index
    %c0_17 = arith.constant 0 : index
    %35 = vector.load %arg6[%c0_16, %c0_17] : memref<8x128xf32, #tpu.memory_space<vmem>>, vector<8x128xf32>
    tpu.vector_store %arg6[%c0_16, %c0_17], %34 {strides = array<i32>} : memref<8x128xf32, #tpu.memory_space<vmem>>, vector<8x128xf32>,
    return
  }
  func.func @transform_0(%arg0: i32) -> (i32, i32) {
    %c0_i32 = arith.constant 0 : i32
    %c0_i32_0 = arith.constant 0 : i32
    return %arg0, %c0_i32 : i32, i32
  }
  func.func @transform_1(%arg0: i32) -> (i32, i32) {
    %c0_i32 = arith.constant 0 : i32
    %c0_i32_0 = arith.constant 0 : i32
    %c0_i32_1 = arith.constant 0 : i32
    return %c0_i32, %c0_i32_0 : i32, i32
  }
  func.func @transform_2(%arg0: i32) -> (i32, i32) {
    %c0_i32 = arith.constant 0 : i32
    %c0_i32_0 = arith.constant 0 : i32
    %c0_i32_1 = arith.constant 0 : i32
    return %c0_i32, %c0_i32_0 : i32, i32
  }
  func.func @transform_3(%arg0: i32) -> (i32, i32) {
    %c0_i32 = arith.constant 0 : i32
    %c0_i32_0 = arith.constant 0 : i32
    %c0_i32_1 = arith.constant 0 : i32
    return %c0_i32, %c0_i32_0 : i32, i32
  }
  func.func @transform_4(%arg0: i32) -> (i32, i32) {
    %c0_i32 = arith.constant 0 : i32
    %c0_i32_0 = arith.constant 0 : i32
    %c0_i32_1 = arith.constant 0 : i32
    return %c0_i32, %c0_i32_0 : i32, i32
  }
  func.func @transform_5(%arg0: i32) -> (i32, i32) {
    %c0_i32 = arith.constant 0 : i32
    %c0_i32_0 = arith.constant 0 : i32
    return %arg0, %c0_i32 : i32, i32
  }
}

</mosaic_0001>

<llo_original>
// kernel: _ac_forward_packed.1
$region0: #{_ac_forward_packed.1}
  #allocation0 [shape = 'u32[]', space=smem, size = 0x4, offset = 0x4, fixed_abs, tag = 'smem constant byte address 0x4 - core index']
  #allocation1 [shape = 'u32[144,128]{1,0:T(1,128)}', space=vmem, size = 0x12000, scoped, tag = 'internal scratch']
  %s0 = inlined_call_operand.hbm [shape: f32[8,16], index: 0, kind: input, shape index: {}]
  %s1 = inlined_call_operand.hbm [shape: bf16[16,128], index: 1, kind: input, shape index: {}]
  %s2 = inlined_call_operand.vmem [shape: f32[1,128], index: 2, kind: input, shape index: {}]
  %s3 = inlined_call_operand.hbm [shape: bf16[128,128], index: 3, kind: input, shape index: {}]
  %s4 = inlined_call_operand.vmem [shape: f32[1,128], index: 4, kind: input, shape index: {}]
  %s5 = inlined_call_operand.hbm [shape: f32[8,128], index: 5, kind: output, shape index: {}]
  %s6 = sld [smem:[#allocation0]]
  $region42: #{_ac_forward_packed.1} parent=0
    _
  %s8 = ssub.s32 1, %s6
  %s9 = scalar_select 0, %s8, %s6
  $region1: #{_ac_forward_packed.1} parent=0
    #allocation2 [shape = 'u8[4096]{0}', space=vmem, size = 0x1000, scoped, tag = 'input window, operand 0, single buffered']
    #allocation3 [shape = 's32[1]{0}', space=sflag, size = 0x4, scoped, tag = 'scoped memory for _ac_forward_packed.1']
    #allocation4 [shape = 's32[1]{0}', space=sflag, size = 0x4, scoped, tag = 'scoped memory for _ac_forward_packed.1']
    #allocation5 [shape = 'u8[4096]{0}', space=vmem, size = 0x1000, scoped, tag = 'input window, operand 1, single buffered']
    #allocation6 [shape = 's32[1]{0}', space=sflag, size = 0x4, scoped, tag = 'scoped memory for _ac_forward_packed.1']
    #allocation7 [shape = 'u8[32768]{0}', space=vmem, size = 0x8000, scoped, tag = 'input window, operand 3, single buffered']
    #allocation8 [shape = 'u8[4096]{0}', space=vmem, size = 0x1000, scoped, tag = 'output window, operand 0, single buffered']
    %10 = vsyncpa [#allocation3], 0
    %11 = vsyncpa [#allocation6], 0
    %12 = vsyncpa [#allocation4], 0
    // Predicated region
    $region2: #{_ac_forward_packed.1} parent=1 // pred_check
      _
    $region3: #{_ac_forward_packed.1} parent=1 // pred_check_branch
      %14 = sbr.rel (0) target = $region5
    $region4: #{_ac_forward_packed.1} parent=1 // pred_region
      %s16 = ssub.s32 128, 128
      %17 = vsyncadd [#allocation3], %s16
      %s19 = sshll.u32 [#allocation2], 4
      %s20 = int_to_ptr.vmem [resolvable:$true] %s19
      %22 = dma.hbm_to_vmem [thread:$0]  %s0, 128, %s20, [#allocation3]
    $region5: #{_ac_forward_packed.1} parent=1 // pred_fallthru
      _
    // Predicated region
    $region6: #{_ac_forward_packed.1} parent=1 // pred_check
      _
    $region7: #{_ac_forward_packed.1} parent=1 // pred_check_branch
      %24 = sbr.rel (0) target = $region9
    $region8: #{_ac_forward_packed.1} parent=1 // pred_region
      %s26 = ssub.s32 128, 128
      %27 = vsyncadd [#allocation6], %s26
      %s28 = sshll.u32 [#allocation5], 4
      %s29 = int_to_ptr.vmem [resolvable:$true] %s28
      %34 = dma.hbm_to_vmem [thread:$0]  %s1, 128, %s29, [#allocation6], 64, 64, 4
    $region9: #{_ac_forward_packed.1} parent=1 // pred_fallthru
      _
    // Predicated region
    $region10: #{_ac_forward_packed.1} parent=1 // pred_check
      _
    $region11: #{_ac_forward_packed.1} parent=1 // pred_check_branch
      %36 = sbr.rel (0) target = $region13
    $region12: #{_ac_forward_packed.1} parent=1 // pred_region
      _
    $region13: #{_ac_forward_packed.1} parent=1 // pred_fallthru
      _
    // Predicated region
    $region14: #{_ac_forward_packed.1} parent=1 // pred_check
      _
    $region15: #{_ac_forward_packed.1} parent=1 // pred_check_branch
      %38 = sbr.rel (0) target = $region17
    $region16: #{_ac_forward_packed.1} parent=1 // pred_region
      %s40 = ssub.s32 1024, 1024
      %41 = vsyncadd [#allocation6], %s40
      %s42 = sshll.u32 [#allocation7], 4
      %s43 = int_to_ptr.vmem [resolvable:$true] %s42
      %48 = dma.hbm_to_vmem [thread:$0]  %s3, 1024, %s43, [#allocation6], 64, 64, 4
    $region17: #{_ac_forward_packed.1} parent=1 // pred_fallthru
      _
    // Predicated region
    $region18: #{_ac_forward_packed.1} parent=1 // pred_check
      _
    $region19: #{_ac_forward_packed.1} parent=1 // pred_check_branch
      %50 = sbr.rel (0) target = $region21
    $region20: #{_ac_forward_packed.1} parent=1 // pred_region
      _
    $region21: #{_ac_forward_packed.1} parent=1 // pred_fallthru
      _
    // Predicated region
    $region22: #{_ac_forward_packed.1} parent=1 // pred_check
      _
    $region23: #{_ac_forward_packed.1} parent=1 // pred_check_branch
      %52 = sbr.rel (0) target = $region25
    $region24: #{_ac_forward_packed.1} parent=1 // pred_region
      %53 = dma.done [#allocation3], 128
    $region25: #{_ac_forward_packed.1} parent=1 // pred_fallthru
      _
    // Predicated region
    $region26: #{_ac_forward_packed.1} parent=1 // pred_check
      _
    $region27: #{_ac_forward_packed.1} parent=1 // pred_check_branch
      %55 = sbr.rel (0) target = $region29
    $region28: #{_ac_forward_packed.1} parent=1 // pred_region
      %56 = dma.done [#allocation6], 128
    $region29: #{_ac_forward_packed.1} parent=1 // pred_fallthru
      _
    // Predicated region
    $region30: #{_ac_forward_packed.1} parent=1 // pred_check
      _
    $region31: #{_ac_forward_packed.1} parent=1 // pred_check_branch
      %58 = sbr.rel (0) target = $region33
    $region32: #{_ac_forward_packed.1} parent=1 // pred_region
      %59 = dma.done [#allocation6], 1024
    $region33: #{_ac_forward_packed.1} parent=1 // pred_fallthru
      _
    %v61 = vld [vmem:[#allocation2] sm:$0xff]
    %v62 = vpack.c.bf16 %v61, %v61
    %v63 = vld [vmem:[#allocation5] sm:$0xf]
    %v64 = vld [vmem:[#allocation5 + $0x4] sm:$0xf]
    %v65 = vld [vmem:[%s2] sm:$0x1]
    %v67 = vlaneseq
    %v68 = vshrl.u32 %v67, 7
    %v69 = vsub.s32 0, %v68
    %v70 = vrot.slane %v65, %v69
    %v74 = vunpack.c.l.b16 %v63
    %v75 = vunpack.c.l.b16 %v64
    %v76 = vpack.c.b16 %v75, %v74
    %vm78 = vcmask 130048
    %v80 = vsel %vm78, %v62, 0
    %82 = vmatprep.subr.bf16.mxu0 0
    %83 = vmatpush1.bf16.msra.mxu0 %v76
    %84 = vmatprep.subr.bf16.mxu0 0
    %85 = vmatpush1.bf16.msra.mxu0 0
    %86 = vmatprep.subr.bf16.mxu0 0
    %87 = vmatpush1.bf16.msra.mxu0 0
    %88 = vmatprep.subr.bf16.mxu0 0
    %89 = vmatpush1.bf16.msra.mxu0 0
    %90 = vmatprep.subr.bf16.mxu0 0
    %91 = vmatpush1.bf16.msra.mxu0 0
    %92 = vmatprep.subr.bf16.mxu0 0
    %93 = vmatpush1.bf16.msra.mxu0 0
    %94 = vmatprep.subr.bf16.mxu0 0
    %95 = vmatpush1.bf16.msra.mxu0 0
    %96 = vmatprep.subr.bf16.mxu0 0
    %97 = vmatpush1.bf16.msra.mxu0 0
    %98 = vmatprep.subr.bf16.mxu0 0
    %99 = vmatpush1.bf16.msra.mxu0 0
    %100 = vmatprep.subr.bf16.mxu0 0
    %101 = vmatpush1.bf16.msra.mxu0 0
    %102 = vmatprep.subr.bf16.mxu0 0
    %103 = vmatpush1.bf16.msra.mxu0 0
    %104 = vmatprep.subr.bf16.mxu0 0
    %105 = vmatpush1.bf16.msra.mxu0 0
    %106 = vmatprep.subr.bf16.mxu0 0
    %107 = vmatpush1.bf16.msra.mxu0 0
    %108 = vmatprep.subr.bf16.mxu0 0
    %109 = vmatpush1.bf16.msra.mxu0 0
    %110 = vmatprep.subr.bf16.mxu0 0
    %111 = vmatpush1.bf16.msra.mxu0 0
    %112 = vmatprep.subr.bf16.mxu0 0
    %113 = vmatpush1.bf16.msra.mxu0 0
    %114 = vmatprep.mubr.bf16.mxu0 0
    %115 = vmatmul.mubr.bf16.gmra.mrb[0].mxu0 %v80
    %v116 = vpop.f32.mrb[0].mxu0
    %v117 = vadd.f32 %v70, %v116
    %v118 = vpop.f32.mrb[0].mxu0
    %v119 = vpop.f32.mrb[0].mxu0
    %v120 = vpop.f32.mrb[0].mxu0
    %121 = vdwg.mxu0
    %v122 = vmax.f32 %v117, 0.0
    %v123 = vpack.c.bf16 %v122, %v122
    %v124 = vld [vmem:[#allocation7] sm:$0xf]
    %v125 = vld [vmem:[#allocation7 + $0x4] sm:$0xf]
    %v126 = vld [vmem:[#allocation7 + $0x8] sm:$0xf]
    %v127 = vld [vmem:[#allocation7 + $0xc] sm:$0xf]
    %v128 = vld [vmem:[#allocation7 + $0x10] sm:$0xf]
    %v129 = vld [vmem:[#allocation7 + $0x14] sm:$0xf]
    %v130 = vld [vmem:[#allocation7 + $0x18] sm:$0xf]
    %v131 = vld [vmem:[#allocation7 + $0x1c] sm:$0xf]
    %v132 = vld [vmem:[#allocation7 + $0x20] sm:$0xf]
    %v133 = vld [vmem:[#allocation7 + $0x24] sm:$0xf]
    %v134 = vld [vmem:[#allocation7 + $0x28] sm:$0xf]
    %v135 = vld [vmem:[#allocation7 + $0x2c] sm:$0xf]
    %v136 = vld [vmem:[#allocation7 + $0x30] sm:$0xf]
    %v137 = vld [vmem:[#allocation7 + $0x34] sm:$0xf]
    %v138 = vld [vmem:[#allocation7 + $0x38] sm:$0xf]
    %v139 = vld [vmem:[#allocation7 + $0x3c] sm:$0xf]
    %v140 = vld [vmem:[%s4] sm:$0x1]
    %v142 = vlaneseq
    %v143 = vshrl.u32 %v142, 7
    %v144 = vsub.s32 0, %v143
    %v145 = vrot.slane %v140, %v144
    %v163 = vunpack.c.l.b16 %v124
    %v164 = vunpack.c.l.b16 %v125
    %v165 = vunpack.c.l.b16 %v126
    %v166 = vunpack.c.l.b16 %v127
    %v167 = vunpack.c.l.b16 %v128
    %v168 = vunpack.c.l.b16 %v129
    %v169 = vunpack.c.l.b16 %v130
    %v170 = vunpack.c.l.b16 %v131
    %v171 = vunpack.c.l.b16 %v132
    %v172 = vunpack.c.l.b16 %v133
    %v173 = vunpack.c.l.b16 %v134
    %v174 = vunpack.c.l.b16 %v135
    %v175 = vunpack.c.l.b16 %v136
    %v176 = vunpack.c.l.b16 %v137
    %v177 = vunpack.c.l.b16 %v138
    %v178 = vunpack.c.l.b16 %v139
    %v179 = vpack.c.b16 %v164, %v163
    %v180 = vpack.c.b16 %v166, %v165
    %v181 = vpack.c.b16 %v168, %v167
    %v182 = vpack.c.b16 %v170, %v169
    %v183 = vpack.c.b16 %v172, %v171
    %v184 = vpack.c.b16 %v174, %v173
    %v185 = vpack.c.b16 %v176, %v175
    %v186 = vpack.c.b16 %v178, %v177
    %195 = vmatprep.subr.bf16.mxu0 0
    %196 = vmatpush1.bf16.msra.mxu0 %v179
    %197 = vmatprep.subr.bf16.mxu0 0
    %198 = vmatpush1.bf16.msra.mxu0 %v180
    %199 = vmatprep.subr.bf16.mxu0 0
    %200 = vmatpush1.bf16.msra.mxu0 %v181
    %201 = vmatprep.subr.bf16.mxu0 0
    %202 = vmatpush1.bf16.msra.mxu0 %v182
    %203 = vmatprep.subr.bf16.mxu0 0
    %204 = vmatpush1.bf16.msra.mxu0 %v183
    %205 = vmatprep.subr.bf16.mxu0 0
    %206 = vmatpush1.bf16.msra.mxu0 %v184
    %207 = vmatprep.subr.bf16.mxu0 0
    %208 = vmatpush1.bf16.msra.mxu0 %v185
    %209 = vmatprep.subr.bf16.mxu0 0
    %210 = vmatpush1.bf16.msra.mxu0 %v186
    %211 = vmatprep.subr.bf16.mxu0 0
    %212 = vmatpush1.bf16.msra.mxu0 0
    %213 = vmatprep.subr.bf16.mxu0 0
    %214 = vmatpush1.bf16.msra.mxu0 0
    %215 = vmatprep.subr.bf16.mxu0 0
    %216 = vmatpush1.bf16.msra.mxu0 0
    %217 = vmatprep.subr.bf16.mxu0 0
    %218 = vmatpush1.bf16.msra.mxu0 0
    %219 = vmatprep.subr.bf16.mxu0 0
    %220 = vmatpush1.bf16.msra.mxu0 0
    %221 = vmatprep.subr.bf16.mxu0 0
    %222 = vmatpush1.bf16.msra.mxu0 0
    %223 = vmatprep.subr.bf16.mxu0 0
    %224 = vmatpush1.bf16.msra.mxu0 0
    %225 = vmatprep.subr.bf16.mxu0 0
    %226 = vmatpush1.bf16.msra.mxu0 0
    %227 = vmatprep.mubr.bf16.mxu0 0
    %228 = vmatmul.mubr.bf16.gmra.mrb[0].mxu0 %v123
    %v229 = vpop.f32.mrb[0].mxu0
    %v230 = vadd.f32 %v145, %v229
    %v231 = vpop.f32.mrb[0].mxu0
    %v232 = vpop.f32.mrb[0].mxu0
    %v233 = vpop.f32.mrb[0].mxu0
    %234 = vdwg.mxu0
    %v235 = vlaneseq
    %v236 = vand.u32 %v235, 127
    %vm237 = vcmp.lt.s32.totalorder %v236, 4
    %v238 = vsel %vm237, %v230, -1e+30
    %239 = vmax.xlane.f32.xlu0 %v238
    %v240 = vpop.xlane.xlu0 %239
    %v241 = vsub.f32 %v230, %v240
    %v242 = vsel %vm237, %v241, -1e+30
    %v243 = vmul.f32 %v242, 1.442695
    %v244 = vpow.pop %v243
    %245 = vadd.xlane.f32.xlu0 %v244
    %v246 = vpop.xlane.xlu0 %245
    %v247 = vrcp.pop %v246
    %v248 = vmul.f32 %v244, %v247
    %vm249 = vcmp.eq.s32.totalorder %v236, 4
    %v250 = vsel %vm249, %v230, %v248
    %251 = vst [vmem:[#allocation8] sm:$0xff] %v250
    // Predicated region
    $region34: #{_ac_forward_packed.1} parent=1 // pred_check
      _
    $region35: #{_ac_forward_packed.1} parent=1 // pred_check_branch
      %253 = sbr.rel (0) target = $region37
    $region36: #{_ac_forward_packed.1} parent=1 // pred_region
      %s255 = ssub.s32 128, 128
      %256 = vsyncadd [#allocation4], %s255
      %s258 = sshll.u32 [#allocation8], 4
      %s259 = int_to_ptr.vmem [resolvable:$true] %s258
      %261 = dma.vmem_to_hbm [thread:$0]  %s259, 128, %s5, [#allocation4]
    $region37: #{_ac_forward_packed.1} parent=1 // pred_fallthru
      _
    // Predicated region
    $region38: #{_ac_forward_packed.1} parent=1 // pred_check
      _
    $region39: #{_ac_forward_packed.1} parent=1 // pred_check_branch
      %263 = sbr.rel (0) target = $region41
    $region40: #{_ac_forward_packed.1} parent=1 // pred_region
      %264 = dma.done [#allocation4], 128
    $region41: #{_ac_forward_packed.1} parent=1 // pred_fallthru
      _
    %265 = vsyncpa [#allocation3], 1
    %266 = vsyncpa [#allocation6], 1
    %267 = vsyncpa [#allocation4], 1

</llo_original>
